<compile_context>
chip_gen: v7x
topology: tpu7x:2x2x1
jax: 0.10.0
libtpu: 0.0.40
codegen_flags: <defaults>
</compile_context>

<pallas_src>
import jax
import jax.numpy as jnp
from jax.experimental import pallas as pl
from jax.experimental.pallas import tpu as pltpu


def _fused_conv_channel_sum_kernel(w_ref, b_ref, x_ref, o_ref):
    # w_ref: (C*9,)          summed conv weights in SMEM, order (c, kh, kw)
    # b_ref: (1,)            summed bias in SMEM
    # x_ref: (1, C, H+2, W+2) zero-padded NCHW input tile for one batch element
    # o_ref: (1, H, W)
    _, C, Hp, Wp = x_ref.shape
    H, W = Hp - 2, Wp - 2

    acc = jnp.zeros((H, W), dtype=jnp.float32)
    for c in range(C):
        plane = x_ref[0, c]                                   # (Hp, Wp) in VMEM
        for kh in range(3):
            for kw in range(3):
                tap = plane[kh:kh + H, kw:kw + W]             # shifted (H, W)
                acc = acc + tap * w_ref[c * 9 + kh * 3 + kw]  # scalar * tile
    o_ref[0] = (acc + b_ref[0]).astype(o_ref.dtype)


@jax.jit
def pattern_c_forward(x_nchw, w1, b1, w2, b2):
    """x_nchw: (N, 3, H, W) f32; w1/w2: (16, 3, 3, 3) OIHW; b1/b2: (16,).
       Returns (N, H, W) f32 == sum(conv1(x), dim=1) + sum(conv2(x), dim=1)."""
    N, C, H, W = x_nchw.shape

    # Collapse the channel-sum into the parameters (exact by linearity).
    w_sum = jnp.sum(w1, axis=0) + jnp.sum(w2, axis=0)              # (C, 3, 3)
    w_flat = w_sum.reshape(C * 9).astype(jnp.float32)              # (c, kh, kw)
    b_sum = (jnp.sum(b1) + jnp.sum(b2)).reshape(1).astype(jnp.float32)

    # Zero spatial padding (padding=1).  Single cheap pass; kernel reads once.
    xpad = jnp.pad(x_nchw, ((0, 0), (0, 0), (1, 1), (1, 1)))       # (N,C,H+2,W+2)

    return pl.pallas_call(
        _fused_conv_channel_sum_kernel,
        out_shape=jax.ShapeDtypeStruct((N, H, W), jnp.float32),
        grid_spec=pltpu.PrefetchScalarGridSpec(
            num_scalar_prefetch=0,
            grid=(N,),
            in_specs=[
                # Tiny params: whole arrays, resident in SMEM for all steps.
                pl.BlockSpec(memory_space=pltpu.MemorySpace.SMEM),   # w_flat
                pl.BlockSpec(memory_space=pltpu.MemorySpace.SMEM),   # b_sum
                # One padded batch element per grid step.
                pl.BlockSpec((1, C, H + 2, W + 2), lambda n: (n, 0, 0, 0)),
            ],
            out_specs=pl.BlockSpec((1, H, W), lambda n: (n, 0, 0)),
        ),
        compiler_params=pltpu.CompilerParams(
            dimension_semantics=("parallel",)),
    )(w_flat, b_sum, xpad)


def _reference(x, w1, b1, w2, b2):
    """Pure-JAX reference: two full convs + channel sums (mirrors PyTorch)."""
    dn = ("NCHW", "OIHW", "NCHW")
    y1 = jax.lax.conv_general_dilated(
        x, w1, (1, 1), ((1, 1), (1, 1)), dimension_numbers=dn
    ) + b1[None, :, None, None]
    y2 = jax.lax.conv_general_dilated(
        x, w2, (1, 1), ((1, 1), (1, 1)), dimension_numbers=dn
    ) + b2[None, :, None, None]
    return jnp.sum(y1, axis=1) + jnp.sum(y2, axis=1)


if __name__ == "__main__":
    key = jax.random.PRNGKey(0)
    k_x, k_w1, k_w2, k_b1, k_b2 = jax.random.split(key, 5)

    # Small shapes consistent with the module: batch=2, in-channels=3, 16x16.
    N, C, H, W = 2, 3, 16, 16
    x = jax.random.normal(k_x, (N, C, H, W), dtype=jnp.float32)

    # Deterministic synthetic parameters (Conv2d(3,16,3,1,1) x2).
    w1 = 0.1 * jax.random.normal(k_w1, (16, 3, 3, 3), dtype=jnp.float32)
    w2 = 0.1 * jax.random.normal(k_w2, (16, 3, 3, 3), dtype=jnp.float32)
    b1 = 0.1 * jax.random.normal(k_b1, (16,), dtype=jnp.float32)
    b2 = 0.1 * jax.random.normal(k_b2, (16,), dtype=jnp.float32)

    out = jax.block_until_ready(pattern_c_forward(x, w1, b1, w2, b2))
    ref = jax.block_until_ready(_reference(x, w1, b1, w2, b2))

    assert out.shape == (N, H, W), out.shape
    assert jnp.allclose(out, ref, atol=1e-3, rtol=1e-3), float(
        jnp.max(jnp.abs(out - ref)))

    print("KERNEL_OK")
</pallas_src>

<mosaic_0001>
module attributes {stable_mosaic.version = 11 : i64} {
  func.func @_fused_conv_channel_sum_kernel(%arg0: i32, %arg1: memref<27xf32, #tpu.memory_space<smem>>, %arg2: memref<1xf32, #tpu.memory_space<smem>>, %arg3: memref<1x3x18x18xf32, #tpu.memory_space<vmem>>, %arg4: memref<1x16x16xf32, #tpu.memory_space<vmem>>) attributes {dimension_semantics = [#tpu.dimension_semantics<parallel>], iteration_bounds = array<i64: 2>, scalar_prefetch = 0 : i64, scratch_operands = 0 : i64, tpu.core_type = #tpu.core_type<tc>, window_params = [{transform_indices = @transform_0, window_bounds = array<i64: 27>}, {transform_indices = @transform_1, window_bounds = array<i64: 1>}, {transform_indices = @transform_2, window_bounds = array<i64: 1, 3, 18, 18>}, {transform_indices = @transform_3, window_bounds = array<i64: 1, 16, 16>}]} {
    %cst = arith.constant 0.000000e+00 : f32
    %0 = vector.broadcast %cst : f32 to vector<16x16xf32>
    %c0 = arith.constant 0 : index
    %c0_0 = arith.constant 0 : index
    %c0_1 = arith.constant 0 : index
    %c0_2 = arith.constant 0 : index
    %1 = vector.load %arg3[%c0, %c0_0, %c0_1, %c0_2] : memref<1x3x18x18xf32, #tpu.memory_space<vmem>>, vector<1x1x18x18xf32>
    %2 = vector.shape_cast %1 : vector<1x1x18x18xf32> to vector<18x18xf32>
    %3 = vector.extract_strided_slice %2 {offsets = [0, 0], sizes = [16, 16], strides = [1, 1]} : vector<18x18xf32> to vector<16x16xf32>
    %c0_3 = arith.constant 0 : index
    %4 = memref.load %arg1[%c0_3] : memref<27xf32, #tpu.memory_space<smem>>
    %5 = vector.broadcast %4 : f32 to vector<16x16xf32>
    %6 = arith.mulf %3, %5 : vector<16x16xf32>
    %7 = arith.addf %0, %6 : vector<16x16xf32>
    %8 = vector.extract_strided_slice %2 {offsets = [0, 1], sizes = [16, 16], strides = [1, 1]} : vector<18x18xf32> to vector<16x16xf32>
    %c1 = arith.constant 1 : index
    %9 = memref.load %arg1[%c1] : memref<27xf32, #tpu.memory_space<smem>>
    %10 = vector.broadcast %9 : f32 to vector<16x16xf32>
    %11 = arith.mulf %8, %10 : vector<16x16xf32>
    %12 = arith.addf %7, %11 : vector<16x16xf32>
    %13 = vector.extract_strided_slice %2 {offsets = [0, 2], sizes = [16, 16], strides = [1, 1]} : vector<18x18xf32> to vector<16x16xf32>
    %c2 = arith.constant 2 : index
    %14 = memref.load %arg1[%c2] : memref<27xf32, #tpu.memory_space<smem>>
    %15 = vector.broadcast %14 : f32 to vector<16x16xf32>
    %16 = arith.mulf %13, %15 : vector<16x16xf32>
    %17 = arith.addf %12, %16 : vector<16x16xf32>
    %18 = vector.extract_strided_slice %2 {offsets = [1, 0], sizes = [16, 16], strides = [1, 1]} : vector<18x18xf32> to vector<16x16xf32>
    %c3 = arith.constant 3 : index
    %19 = memref.load %arg1[%c3] : memref<27xf32, #tpu.memory_space<smem>>
    %20 = vector.broadcast %19 : f32 to vector<16x16xf32>
    %21 = arith.mulf %18, %20 : vector<16x16xf32>
    %22 = arith.addf %17, %21 : vector<16x16xf32>
    %23 = vector.extract_strided_slice %2 {offsets = [1, 1], sizes = [16, 16], strides = [1, 1]} : vector<18x18xf32> to vector<16x16xf32>
    %c4 = arith.constant 4 : index
    %24 = memref.load %arg1[%c4] : memref<27xf32, #tpu.memory_space<smem>>
    %25 = vector.broadcast %24 : f32 to vector<16x16xf32>
    %26 = arith.mulf %23, %25 : vector<16x16xf32>
    %27 = arith.addf %22, %26 : vector<16x16xf32>
    %28 = vector.extract_strided_slice %2 {offsets = [1, 2], sizes = [16, 16], strides = [1, 1]} : vector<18x18xf32> to vector<16x16xf32>
    %c5 = arith.constant 5 : index
    %29 = memref.load %arg1[%c5] : memref<27xf32, #tpu.memory_space<smem>>
    %30 = vector.broadcast %29 : f32 to vector<16x16xf32>
    %31 = arith.mulf %28, %30 : vector<16x16xf32>
    %32 = arith.addf %27, %31 : vector<16x16xf32>
    %33 = vector.extract_strided_slice %2 {offsets = [2, 0], sizes = [16, 16], strides = [1, 1]} : vector<18x18xf32> to vector<16x16xf32>
    %c6 = arith.constant 6 : index
    %34 = memref.load %arg1[%c6] : memref<27xf32, #tpu.memory_space<smem>>
    %35 = vector.broadcast %34 : f32 to vector<16x16xf32>
    %36 = arith.mulf %33, %35 : vector<16x16xf32>
    %37 = arith.addf %32, %36 : vector<16x16xf32>
    %38 = vector.extract_strided_slice %2 {offsets = [2, 1], sizes = [16, 16], strides = [1, 1]} : vector<18x18xf32> to vector<16x16xf32>
    %c7 = arith.constant 7 : index
    %39 = memref.load %arg1[%c7] : memref<27xf32, #tpu.memory_space<smem>>
    %40 = vector.broadcast %39 : f32 to vector<16x16xf32>
    %41 = arith.mulf %38, %40 : vector<16x16xf32>
    %42 = arith.addf %37, %41 : vector<16x16xf32>
    %43 = vector.extract_strided_slice %2 {offsets = [2, 2], sizes = [16, 16], strides = [1, 1]} : vector<18x18xf32> to vector<16x16xf32>
    %c8 = arith.constant 8 : index
    %44 = memref.load %arg1[%c8] : memref<27xf32, #tpu.memory_space<smem>>
    %45 = vector.broadcast %44 : f32 to vector<16x16xf32>
    %46 = arith.mulf %43, %45 : vector<16x16xf32>
    %47 = arith.addf %42, %46 : vector<16x16xf32>
    %c0_4 = arith.constant 0 : index
    %c1_5 = arith.constant 1 : index
    %c0_6 = arith.constant 0 : index
    %c0_7 = arith.constant 0 : index
    %48 = vector.load %arg3[%c0_4, %c1_5, %c0_6, %c0_7] : memref<1x3x18x18xf32, #tpu.memory_space<vmem>>, vector<1x1x18x18xf32>
    %49 = vector.shape_cast %48 : vector<1x1x18x18xf32> to vector<18x18xf32>
    %50 = vector.extract_strided_slice %49 {offsets = [0, 0], sizes = [16, 16], strides = [1, 1]} : vector<18x18xf32> to vector<16x16xf32>
    %c9 = arith.constant 9 : index
    %51 = memref.load %arg1[%c9] : memref<27xf32, #tpu.memory_space<smem>>
    %52 = vector.broadcast %51 : f32 to vector<16x16xf32>
    %53 = arith.mulf %50, %52 : vector<16x16xf32>
    %54 = arith.addf %47, %53 : vector<16x16xf32>
    %55 = vector.extract_strided_slice %49 {offsets = [0, 1], sizes = [16, 16], strides = [1, 1]} : vector<18x18xf32> to vector<16x16xf32>
    %c10 = arith.constant 10 : index
    %56 = memref.load %arg1[%c10] : memref<27xf32, #tpu.memory_space<smem>>
    %57 = vector.broadcast %56 : f32 to vector<16x16xf32>
    %58 = arith.mulf %55, %57 : vector<16x16xf32>
    %59 = arith.addf %54, %58 : vector<16x16xf32>
    %60 = vector.extract_strided_slice %49 {offsets = [0, 2], sizes = [16, 16], strides = [1, 1]} : vector<18x18xf32> to vector<16x16xf32>
    %c11 = arith.constant 11 : index
    %61 = memref.load %arg1[%c11] : memref<27xf32, #tpu.memory_space<smem>>
    %62 = vector.broadcast %61 : f32 to vector<16x16xf32>
    %63 = arith.mulf %60, %62 : vector<16x16xf32>
    %64 = arith.addf %59, %63 : vector<16x16xf32>
    %65 = vector.extract_strided_slice %49 {offsets = [1, 0], sizes = [16, 16], strides = [1, 1]} : vector<18x18xf32> to vector<16x16xf32>
    %c12 = arith.constant 12 : index
    %66 = memref.load %arg1[%c12] : memref<27xf32, #tpu.memory_space<smem>>
    %67 = vector.broadcast %66 : f32 to vector<16x16xf32>
    %68 = arith.mulf %65, %67 : vector<16x16xf32>
    %69 = arith.addf %64, %68 : vector<16x16xf32>
    %70 = vector.extract_strided_slice %49 {offsets = [1, 1], sizes = [16, 16], strides = [1, 1]} : vector<18x18xf32> to vector<16x16xf32>
    %c13 = arith.constant 13 : index
    %71 = memref.load %arg1[%c13] : memref<27xf32, #tpu.memory_space<smem>>
    %72 = vector.broadcast %71 : f32 to vector<16x16xf32>
    %73 = arith.mulf %70, %72 : vector<16x16xf32>
    %74 = arith.addf %69, %73 : vector<16x16xf32>
    %75 = vector.extract_strided_slice %49 {offsets = [1, 2], sizes = [16, 16], strides = [1, 1]} : vector<18x18xf32> to vector<16x16xf32>
    %c14 = arith.constant 14 : index
    %76 = memref.load %arg1[%c14] : memref<27xf32, #tpu.memory_space<smem>>
    %77 = vector.broadcast %76 : f32 to vector<16x16xf32>
    %78 = arith.mulf %75, %77 : vector<16x16xf32>
    %79 = arith.addf %74, %78 : vector<16x16xf32>
    %80 = vector.extract_strided_slice %49 {offsets = [2, 0], sizes = [16, 16], strides = [1, 1]} : vector<18x18xf32> to vector<16x16xf32>
    %c15 = arith.constant 15 : index
    %81 = memref.load %arg1[%c15] : memref<27xf32, #tpu.memory_space<smem>>
    %82 = vector.broadcast %81 : f32 to vector<16x16xf32>
    %83 = arith.mulf %80, %82 : vector<16x16xf32>
    %84 = arith.addf %79, %83 : vector<16x16xf32>
    %85 = vector.extract_strided_slice %49 {offsets = [2, 1], sizes = [16, 16], strides = [1, 1]} : vector<18x18xf32> to vector<16x16xf32>
    %c16 = arith.constant 16 : index
    %86 = memref.load %arg1[%c16] : memref<27xf32, #tpu.memory_space<smem>>
    %87 = vector.broadcast %86 : f32 to vector<16x16xf32>
    %88 = arith.mulf %85, %87 : vector<16x16xf32>
    %89 = arith.addf %84, %88 : vector<16x16xf32>
    %90 = vector.extract_strided_slice %49 {offsets = [2, 2], sizes = [16, 16], strides = [1, 1]} : vector<18x18xf32> to vector<16x16xf32>
    %c17 = arith.constant 17 : index
    %91 = memref.load %arg1[%c17] : memref<27xf32, #tpu.memory_space<smem>>
    %92 = vector.broadcast %91 : f32 to vector<16x16xf32>
    %93 = arith.mulf %90, %92 : vector<16x16xf32>
    %94 = arith.addf %89, %93 : vector<16x16xf32>
    %c0_8 = arith.constant 0 : index
    %c2_9 = arith.constant 2 : index
    %c0_10 = arith.constant 0 : index
    %c0_11 = arith.constant 0 : index
    %95 = vector.load %arg3[%c0_8, %c2_9, %c0_10, %c0_11] : memref<1x3x18x18xf32, #tpu.memory_space<vmem>>, vector<1x1x18x18xf32>
    %96 = vector.shape_cast %95 : vector<1x1x18x18xf32> to vector<18x18xf32>
    %97 = vector.extract_strided_slice %96 {offsets = [0, 0], sizes = [16, 16], strides = [1, 1]} : vector<18x18xf32> to vector<16x16xf32>
    %c18 = arith.constant 18 : index
    %98 = memref.load %arg1[%c18] : memref<27xf32, #tpu.memory_space<smem>>
    %99 = vector.broadcast %98 : f32 to vector<16x16xf32>
    %100 = arith.mulf %97, %99 : vector<16x16xf32>
    %101 = arith.addf %94, %100 : vector<16x16xf32>
    %102 = vector.extract_strided_slice %96 {offsets = [0, 1], sizes = [16, 16], strides = [1, 1]} : vector<18x18xf32> to vector<16x16xf32>
    %c19 = arith.constant 19 : index
    %103 = memref.load %arg1[%c19] : memref<27xf32, #tpu.memory_space<smem>>
    %104 = vector.broadcast %103 : f32 to vector<16x16xf32>
    %105 = arith.mulf %102, %104 : vector<16x16xf32>
    %106 = arith.addf %101, %105 : vector<16x16xf32>
    %107 = vector.extract_strided_slice %96 {offsets = [0, 2], sizes = [16, 16], strides = [1, 1]} : vector<18x18xf32> to vector<16x16xf32>
    %c20 = arith.constant 20 : index
    %108 = memref.load %arg1[%c20] : memref<27xf32, #tpu.memory_space<smem>>
    %109 = vector.broadcast %108 : f32 to vector<16x16xf32>
    %110 = arith.mulf %107, %109 : vector<16x16xf32>
    %111 = arith.addf %106, %110 : vector<16x16xf32>
    %112 = vector.extract_strided_slice %96 {offsets = [1, 0], sizes = [16, 16], strides = [1, 1]} : vector<18x18xf32> to vector<16x16xf32>
    %c21 = arith.constant 21 : index
    %113 = memref.load %arg1[%c21] : memref<27xf32, #tpu.memory_space<smem>>
    %114 = vector.broadcast %113 : f32 to vector<16x16xf32>
    %115 = arith.mulf %112, %114 : vector<16x16xf32>
    %116 = arith.addf %111, %115 : vector<16x16xf32>
    %117 = vector.extract_strided_slice %96 {offsets = [1, 1], sizes = [16, 16], strides = [1, 1]} : vector<18x18xf32> to vector<16x16xf32>
    %c22 = arith.constant 22 : index
    %118 = memref.load %arg1[%c22] : memref<27xf32, #tpu.memory_space<smem>>
    %119 = vector.broadcast %118 : f32 to vector<16x16xf32>
    %120 = arith.mulf %117, %119 : vector<16x16xf32>
    %121 = arith.addf %116, %120 : vector<16x16xf32>
    %122 = vector.extract_strided_slice %96 {offsets = [1, 2], sizes = [16, 16], strides = [1, 1]} : vector<18x18xf32> to vector<16x16xf32>
    %c23 = arith.constant 23 : index
    %123 = memref.load %arg1[%c23] : memref<27xf32, #tpu.memory_space<smem>>
    %124 = vector.broadcast %123 : f32 to vector<16x16xf32>
    %125 = arith.mulf %122, %124 : vector<16x16xf32>
    %126 = arith.addf %121, %125 : vector<16x16xf32>
    %127 = vector.extract_strided_slice %96 {offsets = [2, 0], sizes = [16, 16], strides = [1, 1]} : vector<18x18xf32> to vector<16x16xf32>
    %c24 = arith.constant 24 : index
    %128 = memref.load %arg1[%c24] : memref<27xf32, #tpu.memory_space<smem>>
    %129 = vector.broadcast %128 : f32 to vector<16x16xf32>
    %130 = arith.mulf %127, %129 : vector<16x16xf32>
    %131 = arith.addf %126, %130 : vector<16x16xf32>
    %132 = vector.extract_strided_slice %96 {offsets = [2, 1], sizes = [16, 16], strides = [1, 1]} : vector<18x18xf32> to vector<16x16xf32>
    %c25 = arith.constant 25 : index
    %133 = memref.load %arg1[%c25] : memref<27xf32, #tpu.memory_space<smem>>
    %134 = vector.broadcast %133 : f32 to vector<16x16xf32>
    %135 = arith.mulf %132, %134 : vector<16x16xf32>
    %136 = arith.addf %131, %135 : vector<16x16xf32>
    %137 = vector.extract_strided_slice %96 {offsets = [2, 2], sizes = [16, 16], strides = [1, 1]} : vector<18x18xf32> to vector<16x16xf32>
    %c26 = arith.constant 26 : index
    %138 = memref.load %arg1[%c26] : memref<27xf32, #tpu.memory_space<smem>>
    %139 = vector.broadcast %138 : f32 to vector<16x16xf32>
    %140 = arith.mulf %137, %139 : vector<16x16xf32>
    %141 = arith.addf %136, %140 : vector<16x16xf32>
    %c0_12 = arith.constant 0 : index
    %142 = memref.load %arg2[%c0_12] : memref<1xf32, #tpu.memory_space<smem>>
    %143 = vector.broadcast %142 : f32 to vector<16x16xf32>
    %144 = arith.addf %141, %143 : vector<16x16xf32>
    %c0_13 = arith.constant 0 : index
    %c0_14 = arith.constant 0 : index
    %c0_15 = arith.constant 0 : index
    %145 = vector.load %arg4[%c0_13, %c0_14, %c0_15] : memref<1x16x16xf32, #tpu.memory_space<vmem>>, vector<1x16x16xf32>
    %146 = vector.shape_cast %145 : vector<1x16x16xf32> to vector<16x16xf32>
    %147 = vector.shape_cast %144 : vector<16x16xf32> to vector<1x16x16xf32>
    tpu.vector_store %arg4[%c0_13, %c0_14, %c0_15], %147 {strides = array<i32>} : memref<1x16x16xf32, #tpu.memory_space<vmem>>, vector<1x16x16xf32>,
    return
  }
  func.func @transform_0(%arg0: i32) -> i32 {
    %c0_i32 = arith.constant 0 : i32
    %c0_i32_0 = arith.constant 0 : i32
    return %c0_i32 : i32
  }
  func.func @transform_1(%arg0: i32) -> i32 {
    %c0_i32 = arith.constant 0 : i32
    %c0_i32_0 = arith.constant 0 : i32
    return %c0_i32 : i32
  }
  func.func @transform_2(%arg0: i32) -> (i32, i32, i32, i32) {
    %c0_i32 = arith.constant 0 : i32
    %c0_i32_0 = arith.constant 0 : i32
    %c0_i32_1 = arith.constant 0 : i32
    %c0_i32_2 = arith.constant 0 : i32
    return %arg0, %c0_i32, %c0_i32_0, %c0_i32_1 : i32, i32, i32, i32
  }
  func.func @transform_3(%arg0: i32) -> (i32, i32, i32) {
    %c0_i32 = arith.constant 0 : i32
    %c0_i32_0 = arith.constant 0 : i32
    %c0_i32_1 = arith.constant 0 : i32
    return %arg0, %c0_i32, %c0_i32_0 : i32, i32, i32
  }
}

</mosaic_0001>

<llo_original>
// kernel: pattern_c_forward.1
$region0: #{pattern_c_forward.1}
  #allocation0 [shape = 'u32[]', space=smem, size = 0x4, offset = 0x4, fixed_abs, tag = 'smem constant byte address 0x4 - core index']
  #allocation1 [shape = 'u32[144,128]{1,0:T(1,128)}', space=vmem, size = 0x12000, scoped, tag = 'internal scratch']
  #allocation2 [shape = 'f32[1]{0:T(128)S(6)}', space=smem, size = 0x200, scoped, tag = 'scoped memory for pattern_c_forward.1']
  %s0 = inlined_call_operand.vmem [shape: f32[27], index: 0, kind: input, shape index: {}]
  %s1 = inlined_call_operand.<no memory space> [shape: f32[1], index: 1, kind: input, shape index: {}]
  %s2 = inlined_call_operand.vmem [shape: f32[2,3,18,18], index: 2, kind: input, shape index: {}]
  %s3 = inlined_call_operand.hbm [shape: f32[2,16,16], index: 3, kind: output, shape index: {}]
  %s4 = sld [smem:[#allocation0]]
  $region49: #{pattern_c_forward.1} parent=0
    _
  %s6 = ssub.s32 1, %s4
  %s7 = scalar_select 0, %s6, %s4
  %8 = sst [smem:[#allocation2]] %s1
  $region1: #{pattern_c_forward.1} parent=0
    #allocation3 [shape = 'u8[512]{0}', space=smem, size = 0x200, scoped, tag = 'input window, operand 0, single buffered']
    #allocation4 [shape = 's32[2]{0}', space=sflag, size = 0x8, scoped, tag = 'scoped memory for pattern_c_forward.1']
    #allocation5 [shape = 's32[2]{0}', space=sflag, size = 0x8, scoped, tag = 'scoped memory for pattern_c_forward.1']
    #allocation6 [shape = 'u8[16384]{0}', space=vmem, size = 0x4000, scoped, tag = 'output window, operand 0']
    %9 = vsyncpa [#allocation5], 0
    %10 = vsyncpa [#allocation4], 0
    %s11 = scalar_lea.sflag [#allocation4], 1
    %12 = vsyncpa %s11, 0
    loop: start=0, step=1, limit=4
    $region2: #{pattern_c_forward.1} parent=1 // loop_pre_header
      _
    $region3: #{pattern_c_forward.1} parent=1 // loop_header
      %s14 = sphi 0, %s18
      %p15 = scmp.ge.s32.totalorder %s14, 4
      %s22 = sphi 0, %s22
      %s24 = sphi 0, %s22
      %s25 = sphi 0, %s24
      %s39 = sphi 0, %s25
      %s43 = sphi 0, %s43
      %s45 = sphi 0, %s43
      %s46 = sphi 0, %s45
      %s60 = sphi 0, %s46
      %s66 = sphi 0, %s68
      %s69 = sphi 0, %s66
      %s70 = sphi 0, %s69
      %s86 = sphi 0, %s70
      %s92 = sphi 0, %s94
      %s95 = sphi 0, %s92
      %s96 = sphi 0, %s95
      %s112 = sphi 0, %s96
    $region4: #{pattern_c_forward.1} parent=1 // loop_header_branch
      %17 = sbr.rel (%p15) target = $region8
    $region5: #{pattern_c_forward.1} parent=1 // loop_body
      %s19 = ssub.s32 %s14, 1
      %s20 = ssub.s32 %s14, 2
      %s21 = sadd.s32 %s14, 1
      %s23 = sadd.s32 %s22, 1
      %p26 = scmp.eq.s32.totalorder %s14, 1
      %p27 = scmp.ne.s32.totalorder %s22, %s24
      %p28 = scmp.eq.s32.totalorder %s14, 0
      %p29 = por %p27, %p28
      %p30 = scmp.ne.s32.totalorder %s22, %s24
      %p31 = scmp.eq.s32.totalorder %s19, 1
      %p32 = por %p30, %p31
      %p33 = scmp.ne.s32.totalorder %s24, %s25
      %p34 = scmp.eq.s32.totalorder %s19, 0
      %p35 = por %p33, %p34
      %p36 = scmp.ne.s32.totalorder %s24, %s25
      %p37 = scmp.eq.s32.totalorder %s20, 1
      %p38 = por %p36, %p37
      %p40 = scmp.ne.s32.totalorder %s25, %s39
      %p41 = scmp.eq.s32.totalorder %s20, 0
      %p42 = por %p40, %p41
      %s44 = sadd.s32 %s43, 1
      %p47 = scmp.eq.s32.totalorder %s14, 1
      %p48 = scmp.ne.s32.totalorder %s43, %s45
      %p49 = scmp.eq.s32.totalorder %s14, 0
      %p50 = por %p48, %p49
      %p51 = scmp.ne.s32.totalorder %s43, %s45
      %p52 = scmp.eq.s32.totalorder %s19, 1
      %p53 = por %p51, %p52
      %p54 = scmp.ne.s32.totalorder %s45, %s46
      %p55 = scmp.eq.s32.totalorder %s19, 0
      %p56 = por %p54, %p55
      %p57 = scmp.ne.s32.totalorder %s45, %s46
      %p58 = scmp.eq.s32.totalorder %s20, 1
      %p59 = por %p57, %p58
      %p61 = scmp.ne.s32.totalorder %s46, %s60
      %p62 = scmp.eq.s32.totalorder %s20, 0
      %p63 = por %p61, %p62
      %s64 = ssub.s32 %s14, %s21
      %p65 = scmp.eq.s32.totalorder %s64, 0
      %s67 = sadd.s32 %s66, 1
      %s68 = scalar_select %p65, %s66, %s67
      %p71 = pneg %p65
      %p72 = scmp.eq.s32.totalorder %s14, 1
      %p73 = por %p71, %p72
      %p74 = scmp.ne.s32.totalorder %s66, %s69
      %p75 = scmp.eq.s32.totalorder %s14, 0
      %p76 = por %p74, %p75
      %p77 = scmp.ne.s32.totalorder %s66, %s69
      %p78 = scmp.eq.s32.totalorder %s19, 1
      %p79 = por %p77, %p78
      %p80 = scmp.ne.s32.totalorder %s69, %s70
      %p81 = scmp.eq.s32.totalorder %s19, 0
      %p82 = por %p80, %p81
      %p83 = scmp.ne.s32.totalorder %s69, %s70
      %p84 = scmp.eq.s32.totalorder %s20, 1
      %p85 = por %p83, %p84
      %p87 = scmp.ne.s32.totalorder %s70, %s86
      %p88 = scmp.eq.s32.totalorder %s20, 0
      %p89 = por %p87, %p88
      %s90 = ssub.s32 %s14, %s21
      %p91 = scmp.eq.s32.totalorder %s90, 0
      %s93 = sadd.s32 %s92, 1
      %s94 = scalar_select %p91, %s92, %s93
      %p97 = pneg %p91
      %p98 = scmp.eq.s32.totalorder %s14, 1
      %p99 = por %p97, %p98
      %p100 = scmp.ne.s32.totalorder %s92, %s95
      %p101 = scmp.eq.s32.totalorder %s14, 0
      %p102 = por %p100, %p101
      %p103 = scmp.ne.s32.totalorder %s92, %s95
      %p104 = scmp.eq.s32.totalorder %s19, 1
      %p105 = por %p103, %p104
      %p106 = scmp.ne.s32.totalorder %s95, %s96
      %p107 = scmp.eq.s32.totalorder %s19, 0
      %p108 = por %p106, %p107
      %p109 = scmp.ne.s32.totalorder %s95, %s96
      %p110 = scmp.eq.s32.totalorder %s20, 1
      %p111 = por %p109, %p110
      %p113 = scmp.ne.s32.totalorder %s96, %s112
      %p114 = scmp.eq.s32.totalorder %s20, 0
      %p115 = por %p113, %p114
      %p116 = scmp.le.s32.totalorder 1, %s14
      %p117 = scmp.lt.s32.totalorder %s14, 3
      %p118 = pnand %p116, %p117
      %p119 = pneg %p118
      // Predicated region
      $region9: #{pattern_c_forward.1} parent=5 // pred_check
        _
      $region10: #{pattern_c_forward.1} parent=5 // pred_check_branch
        %121 = sbr.rel (%p118) target = $region12
      $region11: #{pattern_c_forward.1} parent=5 // pred_region
        %s122 = ssub.s32 %s14, 1
        // Predicated region
        $region13: #{pattern_c_forward.1} parent=11 // pred_check
          %p123 = pneg %p35
        $region14: #{pattern_c_forward.1} parent=11 // pred_check_branch
          %125 = sbr.rel (%p123) target = $region16
        $region15: #{pattern_c_forward.1} parent=11 // pred_region
          %s127 = ssub.s32 16, 16
          %128 = vsyncadd [#allocation5], %s127
          %s130 = sshll.u32 %s0, 4
          %s131 = int_to_ptr.vmem [resolvable:$true] %s130
          %133 = dma.vmem_to_smem %s131, 16, [#allocation3], [#allocation5]
        $region16: #{pattern_c_forward.1} parent=11 // pred_fallthru
          _
        // Predicated region
        $region17: #{pattern_c_forward.1} parent=11 // pred_check
          %p134 = pneg %p56
        $region18: #{pattern_c_forward.1} parent=11 // pred_check_branch
          %136 = sbr.rel (%p134) target = $region20
        $region19: #{pattern_c_forward.1} parent=11 // pred_region
          _
        $region20: #{pattern_c_forward.1} parent=11 // pred_fallthru
          _
      $region12: #{pattern_c_forward.1} parent=5 // pred_fallthru
        _
      %p137 = scmp.lt.s32.totalorder %s14, 2
      // Predicated region
      $region21: #{pattern_c_forward.1} parent=5 // pred_check
        %p138 = pneg %p137
      $region22: #{pattern_c_forward.1} parent=5 // pred_check_branch
        %140 = sbr.rel (%p138) target = $region24
      $region23: #{pattern_c_forward.1} parent=5 // pred_region
        // Predicated region
        $region25: #{pattern_c_forward.1} parent=23 // pred_check
          %p141 = pneg %p76
        $region26: #{pattern_c_forward.1} parent=23 // pred_check_branch
          %143 = sbr.rel (%p141) target = $region28
        $region27: #{pattern_c_forward.1} parent=23 // pred_region
          %p144 = scmp.lt.s32.totalorder %s14, 1
          %s145 = scalar_select %p144, %s14, 1
          %s146 = smul.addr %s145, 9
          %s147 = smul.addr %s146, 8
          %s148 = scalar_lea.vmem %s2, %s147
        $region28: #{pattern_c_forward.1} parent=23 // pred_fallthru
          _
      $region24: #{pattern_c_forward.1} parent=5 // pred_fallthru
        _
      %p149 = scmp.le.s32.totalorder 1, %s14
      %p150 = scmp.lt.s32.totalorder %s14, 3
      %p151 = pnand %p149, %p150
      %p152 = pneg %p151
      // Predicated region
      $region29: #{pattern_c_forward.1} parent=5 // pred_check
        _
      $region30: #{pattern_c_forward.1} parent=5 // pred_check_branch
        %154 = sbr.rel (%p151) target = $region32
      $region31: #{pattern_c_forward.1} parent=5 // pred_region
        %s155 = ssub.s32 %s14, 1
        // Predicated region
        $region33: #{pattern_c_forward.1} parent=31 // pred_check
          %p156 = pneg %p35
        $region34: #{pattern_c_forward.1} parent=31 // pred_check_branch
          %158 = sbr.rel (%p156) target = $region36
        $region35: #{pattern_c_forward.1} parent=31 // pred_region
          %159 = dma.done [#allocation5], 16
        $region36: #{pattern_c_forward.1} parent=31 // pred_fallthru
          _
        %160 = sfence
        %p161 = pneg %p35
        %p162 = pneg %p32
        %p163 = pneg %p56
        %p164 = pneg %p53
        %p165 = scmp.lt.s32.totalorder %s19, 1
        %s166 = scalar_select %p165, %s19, 1
        %s167 = smul.addr %s166, 9
        %s168 = smul.addr %s167, 8
        %s169 = scalar_lea.vmem %s2, %s168
        %p170 = pneg %p82
        %p171 = pneg %p79
        %p172 = pneg %p108
        %p173 = pneg %p105
        %s174 = sand.u32 %s95, 1
        %s175 = scalar_lea.sflag [#allocation4], %s174
        %s176 = sand.u32 %s95, 1
        %s177 = smul.addr %s176, 16
        %s178 = scalar_lea.vmem [#allocation6], %s177
        %p179 = scmp.lt.s32.totalorder %s19, 1
        %s180 = scalar_select %p179, %s19, 1
        %s181 = smul.addr %s180, 9
        %s182 = smul.addr %s181, 8
        %s183 = scalar_lea.vmem %s2, %s182
        %v184 = vld [vmem:[%s183] sm:$0xff]
        %v185 = vld [vmem:[%s183 + $0x8] sm:$0xff]
        %v186 = vld [vmem:[%s183 + $0x10] sm:$0x3]
        %s187 = sld [smem:[#allocation3]]
        %v188 = vstv %s187
        %v189 = vmul.f32 %v184, %v188
        %v190 = vmul.f32 %v185, %v188
        %v191 = vadd.f32 %v189, 0.0
        %v192 = vadd.f32 %v190, 0.0
        %s193 = sld [smem:[#allocation3 + $0x1]]
        %v194 = vstv %s193
        %v195 = vmul.f32 %v184, %v194
        %v196 = vmul.f32 %v185, %v194
        %199 = vrot.lane.b32.xlu0 %v195, 127
        %v200 = vpop.permute.xlu0 %199
        %201 = vrot.lane.b32.xlu0 %v196, 127
        %v202 = vpop.permute.xlu0 %201
        %v205 = vadd.f32 %v191, %v200
        %v206 = vadd.f32 %v192, %v202
        %s207 = sld [smem:[#allocation3 + $0x2]]
        %v208 = vstv %s207
        %v209 = vmul.f32 %v184, %v208
        %v210 = vmul.f32 %v185, %v208
        %213 = vrot.lane.b32.xlu0 %v209, 126
        %v214 = vpop.permute.xlu0 %213
        %215 = vrot.lane.b32.xlu0 %v210, 126
        %v216 = vpop.permute.xlu0 %215
        %v219 = vadd.f32 %v205, %v214
        %v220 = vadd.f32 %v206, %v216
        %s221 = sld [smem:[#allocation3 + $0x3]]
        %v222 = vstv %s221
        %v223 = vmul.f32 %v184, %v222
        %v224 = vmul.f32 %v185, %v222
        %v225 = vmul.f32 %v186, %v222
        %vm229 = vcmask 1046528
        %v230 = vrot.slane %v223, 1
        %v231 = vrot.slane %v224, 1
        %v232 = vsel %vm229, %v230, %v231
        %v233 = vrot.slane %v225, 1
        %v234 = vsel %vm229, %v231, %v233
        %v237 = vadd.f32 %v219, %v232
        %v238 = vadd.f32 %v220, %v234
        %s239 = sld [smem:[#allocation3 + $0x4]]
        %v240 = vstv %s239
        %v241 = vmul.f32 %v184, %v240
        %v242 = vmul.f32 %v185, %v240
        %v243 = vmul.f32 %v186, %v240
        %v247 = vrot.slane %v241, 1
        %v248 = vrot.slane %v242, 1
        %v249 = vsel %vm229, %v247, %v248
        %v250 = vrot.slane %v243, 1
        %v251 = vsel %vm229, %v248, %v250
        %252 = vrot.lane.b32.xlu0 %v249, 127
        %v253 = vpop.permute.xlu0 %252
        %254 = vrot.lane.b32.xlu0 %v251, 127
        %v255 = vpop.permute.xlu0 %254
        %v258 = vadd.f32 %v237, %v253
        %v259 = vadd.f32 %v238, %v255
        %s260 = sld [smem:[#allocation3 + $0x5]]
        %v261 = vstv %s260
        %v262 = vmul.f32 %v184, %v261
        %v263 = vmul.f32 %v185, %v261
        %v264 = vmul.f32 %v186, %v261
        %v268 = vrot.slane %v262, 1
        %v269 = vrot.slane %v263, 1
        %v270 = vsel %vm229, %v268, %v269
        %v271 = vrot.slane %v264, 1
        %v272 = vsel %vm229, %v269, %v271
        %273 = vrot.lane.b32.xlu0 %v270, 126
        %v274 = vpop.permute.xlu0 %273
        %275 = vrot.lane.b32.xlu0 %v272, 126
        %v276 = vpop.permute.xlu0 %275
        %v279 = vadd.f32 %v258, %v274
        %v280 = vadd.f32 %v259, %v276
        %s281 = sld [smem:[#allocation3 + $0x6]]
        %v282 = vstv %s281
        %v283 = vmul.f32 %v184, %v282
        %v284 = vmul.f32 %v185, %v282
        %v285 = vmul.f32 %v186, %v282
        %vm289 = vcmask 1045504
        %v290 = vrot.slane %v283, 2
        %v291 = vrot.slane %v284, 2
        %v292 = vsel %vm289, %v290, %v291
        %v293 = vrot.slane %v285, 2
        %v294 = vsel %vm289, %v291, %v293
        %v297 = vadd.f32 %v279, %v292
        %v298 = vadd.f32 %v280, %v294
        %s299 = sld [smem:[#allocation3 + $0x7]]
        %v300 = vstv %s299
        %v301 = vmul.f32 %v184, %v300
        %v302 = vmul.f32 %v185, %v300
        %v303 = vmul.f32 %v186, %v300
        %v307 = vrot.slane %v301, 2
        %v308 = vrot.slane %v302, 2
        %v309 = vsel %vm289, %v307, %v308
        %v310 = vrot.slane %v303, 2
        %v311 = vsel %vm289, %v308, %v310
        %312 = vrot.lane.b32.xlu0 %v309, 127
        %v313 = vpop.permute.xlu0 %312
        %314 = vrot.lane.b32.xlu0 %v311, 127
        %v315 = vpop.permute.xlu0 %314
        %v318 = vadd.f32 %v297, %v313
        %v319 = vadd.f32 %v298, %v315
        %s320 = sld [smem:[#allocation3 + $0x8]]
        %v321 = vstv %s320
        %v322 = vmul.f32 %v184, %v321
        %v323 = vmul.f32 %v185, %v321
        %v324 = vmul.f32 %v186, %v321
        %v328 = vrot.slane %v322, 2
        %v329 = vrot.slane %v323, 2
        %v330 = vsel %vm289, %v328, %v329
        %v331 = vrot.slane %v324, 2
        %v332 = vsel %vm289, %v329, %v331
        %333 = vrot.lane.b32.xlu0 %v330, 126
        %v334 = vpop.permute.xlu0 %333
        %335 = vrot.lane.b32.xlu0 %v332, 126
        %v336 = vpop.permute.xlu0 %335
        %v339 = vadd.f32 %v318, %v334
        %v340 = vadd.f32 %v319, %v336
        %s341 = scalar_lea.vmem %s183, 24
        %v342 = vld [vmem:[%s341] sm:$0xff]
        %v343 = vld [vmem:[%s341 + $0x8] sm:$0xff]
        %v344 = vld [vmem:[%s341 + $0x10] sm:$0x3]
        %s345 = sld [smem:[#allocation3 + $0x9]]
        %v346 = vstv %s345
        %v347 = vmul.f32 %v342, %v346
        %v348 = vmul.f32 %v343, %v346
        %v349 = vadd.f32 %v339, %v347
        %v350 = vadd.f32 %v340, %v348
        %s351 = sld [smem:[#allocation3 + $0xa]]
        %v352 = vstv %s351
        %v353 = vmul.f32 %v342, %v352
        %v354 = vmul.f32 %v343, %v352
        %357 = vrot.lane.b32.xlu0 %v353, 127
        %v358 = vpop.permute.xlu0 %357
        %359 = vrot.lane.b32.xlu0 %v354, 127
        %v360 = vpop.permute.xlu0 %359
        %v363 = vadd.f32 %v349, %v358
        %v364 = vadd.f32 %v350, %v360
        %s365 = sld [smem:[#allocation3 + $0xb]]
        %v366 = vstv %s365
        %v367 = vmul.f32 %v342, %v366
        %v368 = vmul.f32 %v343, %v366
        %371 = vrot.lane.b32.xlu0 %v367, 126
        %v372 = vpop.permute.xlu0 %371
        %373 = vrot.lane.b32.xlu0 %v368, 126
        %v374 = vpop.permute.xlu0 %373
        %v377 = vadd.f32 %v363, %v372
        %v378 = vadd.f32 %v364, %v374
        %s379 = sld [smem:[#allocation3 + $0xc]]
        %v380 = vstv %s379
        %v381 = vmul.f32 %v342, %v380
        %v382 = vmul.f32 %v343, %v380
        %v383 = vmul.f32 %v344, %v380
        %v387 = vrot.slane %v381, 1
        %v388 = vrot.slane %v382, 1
        %v389 = vsel %vm229, %v387, %v388
        %v390 = vrot.slane %v383, 1
        %v391 = vsel %vm229, %v388, %v390
        %v394 = vadd.f32 %v377, %v389
        %v395 = vadd.f32 %v378, %v391
        %s396 = sld [smem:[#allocation3 + $0xd]]
        %v397 = vstv %s396
        %v398 = vmul.f32 %v342, %v397
        %v399 = vmul.f32 %v343, %v397
        %v400 = vmul.f32 %v344, %v397
        %v404 = vrot.slane %v398, 1
        %v405 = vrot.slane %v399, 1
        %v406 = vsel %vm229, %v404, %v405
        %v407 = vrot.slane %v400, 1
        %v408 = vsel %vm229, %v405, %v407
        %409 = vrot.lane.b32.xlu0 %v406, 127
        %v410 = vpop.permute.xlu0 %409
        %411 = vrot.lane.b32.xlu0 %v408, 127
        %v412 = vpop.permute.xlu0 %411
        %v415 = vadd.f32 %v394, %v410
        %v416 = vadd.f32 %v395, %v412
        %s417 = sld [smem:[#allocation3 + $0xe]]
        %v418 = vstv %s417
        %v419 = vmul.f32 %v342, %v418
        %v420 = vmul.f32 %v343, %v418
        %v421 = vmul.f32 %v344, %v418
        %v425 = vrot.slane %v419, 1
        %v426 = vrot.slane %v420, 1
        %v427 = vsel %vm229, %v425, %v426
        %v428 = vrot.slane %v421, 1
        %v429 = vsel %vm229, %v426, %v428
        %430 = vrot.lane.b32.xlu0 %v427, 126
        %v431 = vpop.permute.xlu0 %430
        %432 = vrot.lane.b32.xlu0 %v429, 126
        %v433 = vpop.permute.xlu0 %432
        %v436 = vadd.f32 %v415, %v431
        %v437 = vadd.f32 %v416, %v433
        %s438 = sld [smem:[#allocation3 + $0xf]]
        %v439 = vstv %s438
        %v440 = vmul.f32 %v342, %v439
        %v441 = vmul.f32 %v343, %v439
        %v442 = vmul.f32 %v344, %v439
        %v446 = vrot.slane %v440, 2
        %v447 = vrot.slane %v441, 2
        %v448 = vsel %vm289, %v446, %v447
        %v449 = vrot.slane %v442, 2
        %v450 = vsel %vm289, %v447, %v449
        %v453 = vadd.f32 %v436, %v448
        %v454 = vadd.f32 %v437, %v450
        %s455 = sld [smem:[#allocation3 + $0x10]]
        %v456 = vstv %s455
        %v457 = vmul.f32 %v342, %v456
        %v458 = vmul.f32 %v343, %v456
        %v459 = vmul.f32 %v344, %v456
        %v463 = vrot.slane %v457, 2
        %v464 = vrot.slane %v458, 2
        %v465 = vsel %vm289, %v463, %v464
        %v466 = vrot.slane %v459, 2
        %v467 = vsel %vm289, %v464, %v466
        %468 = vrot.lane.b32.xlu0 %v465, 127
        %v469 = vpop.permute.xlu0 %468
        %470 = vrot.lane.b32.xlu0 %v467, 127
        %v471 = vpop.permute.xlu0 %470
        %v474 = vadd.f32 %v453, %v469
        %v475 = vadd.f32 %v454, %v471
        %s476 = sld [smem:[#allocation3 + $0x11]]
        %v477 = vstv %s476
        %v478 = vmul.f32 %v342, %v477
        %v479 = vmul.f32 %v343, %v477
        %v480 = vmul.f32 %v344, %v477
        %v484 = vrot.slane %v478, 2
        %v485 = vrot.slane %v479, 2
        %v486 = vsel %vm289, %v484, %v485
        %v487 = vrot.slane %v480, 2
        %v488 = vsel %vm289, %v485, %v487
        %489 = vrot.lane.b32.xlu0 %v486, 126
        %v490 = vpop.permute.xlu0 %489
        %491 = vrot.lane.b32.xlu0 %v488, 126
        %v492 = vpop.permute.xlu0 %491
        %v495 = vadd.f32 %v474, %v490
        %v496 = vadd.f32 %v475, %v492
        %s497 = scalar_lea.vmem %s183, 48
        %v498 = vld [vmem:[%s497] sm:$0xff]
        %v499 = vld [vmem:[%s497 + $0x8] sm:$0xff]
        %v500 = vld [vmem:[%s497 + $0x10] sm:$0x3]
        %s501 = sld [smem:[#allocation3 + $0x12]]
        %v502 = vstv %s501
        %v503 = vmul.f32 %v498, %v502
        %v504 = vmul.f32 %v499, %v502
        %v505 = vadd.f32 %v495, %v503
        %v506 = vadd.f32 %v496, %v504
        %s507 = sld [smem:[#allocation3 + $0x13]]
        %v508 = vstv %s507
        %v509 = vmul.f32 %v498, %v508
        %v510 = vmul.f32 %v499, %v508
        %513 = vrot.lane.b32.xlu0 %v509, 127
        %v514 = vpop.permute.xlu0 %513
        %515 = vrot.lane.b32.xlu0 %v510, 127
        %v516 = vpop.permute.xlu0 %515
        %v519 = vadd.f32 %v505, %v514
        %v520 = vadd.f32 %v506, %v516
        %s521 = sld [smem:[#allocation3 + $0x14]]
        %v522 = vstv %s521
        %v523 = vmul.f32 %v498, %v522
        %v524 = vmul.f32 %v499, %v522
        %527 = vrot.lane.b32.xlu0 %v523, 126
        %v528 = vpop.permute.xlu0 %527
        %529 = vrot.lane.b32.xlu0 %v524, 126
        %v530 = vpop.permute.xlu0 %529
        %v533 = vadd.f32 %v519, %v528
        %v534 = vadd.f32 %v520, %v530
        %s535 = sld [smem:[#allocation3 + $0x15]]
        %v536 = vstv %s535
        %v537 = vmul.f32 %v498, %v536
        %v538 = vmul.f32 %v499, %v536
        %v539 = vmul.f32 %v500, %v536
        %v543 = vrot.slane %v537, 1
        %v544 = vrot.slane %v538, 1
        %v545 = vsel %vm229, %v543, %v544
        %v546 = vrot.slane %v539, 1
        %v547 = vsel %vm229, %v544, %v546
        %v550 = vadd.f32 %v533, %v545
        %v551 = vadd.f32 %v534, %v547
        %s552 = sld [smem:[#allocation3 + $0x16]]
        %v553 = vstv %s552
        %v554 = vmul.f32 %v498, %v553
        %v555 = vmul.f32 %v499, %v553
        %v556 = vmul.f32 %v500, %v553
        %v560 = vrot.slane %v554, 1
        %v561 = vrot.slane %v555, 1
        %v562 = vsel %vm229, %v560, %v561
        %v563 = vrot.slane %v556, 1
        %v564 = vsel %vm229, %v561, %v563
        %565 = vrot.lane.b32.xlu0 %v562, 127
        %v566 = vpop.permute.xlu0 %565
        %567 = vrot.lane.b32.xlu0 %v564, 127
        %v568 = vpop.permute.xlu0 %567
        %v571 = vadd.f32 %v550, %v566
        %v572 = vadd.f32 %v551, %v568
        %s573 = sld [smem:[#allocation3 + $0x17]]
        %v574 = vstv %s573
        %v575 = vmul.f32 %v498, %v574
        %v576 = vmul.f32 %v499, %v574
        %v577 = vmul.f32 %v500, %v574
        %v581 = vrot.slane %v575, 1
        %v582 = vrot.slane %v576, 1
        %v583 = vsel %vm229, %v581, %v582
        %v584 = vrot.slane %v577, 1
        %v585 = vsel %vm229, %v582, %v584
        %586 = vrot.lane.b32.xlu0 %v583, 126
        %v587 = vpop.permute.xlu0 %586
        %588 = vrot.lane.b32.xlu0 %v585, 126
        %v589 = vpop.permute.xlu0 %588
        %v592 = vadd.f32 %v571, %v587
        %v593 = vadd.f32 %v572, %v589
        %s594 = sld [smem:[#allocation3 + $0x18]]
        %v595 = vstv %s594
        %v596 = vmul.f32 %v498, %v595
        %v597 = vmul.f32 %v499, %v595
        %v598 = vmul.f32 %v500, %v595
        %v602 = vrot.slane %v596, 2
        %v603 = vrot.slane %v597, 2
        %v604 = vsel %vm289, %v602, %v603
        %v605 = vrot.slane %v598, 2
        %v606 = vsel %vm289, %v603, %v605
        %v609 = vadd.f32 %v592, %v604
        %v610 = vadd.f32 %v593, %v606
        %s611 = sld [smem:[#allocation3 + $0x19]]
        %v612 = vstv %s611
        %v613 = vmul.f32 %v498, %v612
        %v614 = vmul.f32 %v499, %v612
        %v615 = vmul.f32 %v500, %v612
        %v619 = vrot.slane %v613, 2
        %v620 = vrot.slane %v614, 2
        %v621 = vsel %vm289, %v619, %v620
        %v622 = vrot.slane %v615, 2
        %v623 = vsel %vm289, %v620, %v622
        %624 = vrot.lane.b32.xlu0 %v621, 127
        %v625 = vpop.permute.xlu0 %624
        %626 = vrot.lane.b32.xlu0 %v623, 127
        %v627 = vpop.permute.xlu0 %626
        %v630 = vadd.f32 %v609, %v625
        %v631 = vadd.f32 %v610, %v627
        %s632 = sld [smem:[#allocation3 + $0x1a]]
        %v633 = vstv %s632
        %v634 = vmul.f32 %v498, %v633
        %v635 = vmul.f32 %v499, %v633
        %v636 = vmul.f32 %v500, %v633
        %v640 = vrot.slane %v634, 2
        %v641 = vrot.slane %v635, 2
        %v642 = vsel %vm289, %v640, %v641
        %v643 = vrot.slane %v636, 2
        %v644 = vsel %vm289, %v641, %v643
        %645 = vrot.lane.b32.xlu0 %v642, 126
        %v646 = vpop.permute.xlu0 %645
        %647 = vrot.lane.b32.xlu0 %v644, 126
        %v648 = vpop.permute.xlu0 %647
        %v651 = vadd.f32 %v630, %v646
        %v652 = vadd.f32 %v631, %v648
        %s653 = sld [smem:[#allocation2]]
        %v654 = vstv %s653
        %v655 = vadd.f32 %v651, %v654
        %v656 = vadd.f32 %v652, %v654
        %vm657 = vcmask 130048
        %658 = vst.msk [vmem:[%s178] sm:$0xff] %vm657, %v655
        %659 = vst.msk [vmem:[%s178 + $0x8] sm:$0xff] %vm657, %v656
        %s660 = sand.u32 %s95, 1
        %s661 = scalar_lea.sflag [#allocation4], %s660
        %s662 = sand.u32 %s95, 1
        %s663 = smul.addr %s662, 16
        %s664 = scalar_lea.vmem [#allocation6], %s663
        // Predicated region
        $region37: #{pattern_c_forward.1} parent=31 // pred_check
          %p665 = pneg %p105
        $region38: #{pattern_c_forward.1} parent=31 // pred_check_branch
          %667 = sbr.rel (%p665) target = $region40
        $region39: #{pattern_c_forward.1} parent=31 // pred_region
          %s669 = ssub.s32 256, 256
          %670 = vsyncadd %s661, %s669
          %s671 = smul.addr %s19, 2
          %s672 = smul.addr %s671, 128
          %s673 = scalar_lea.hbm %s3, %s672
          %s674 = sshll.u32 %s664, 4
          %s675 = int_to_ptr.vmem [resolvable:$true] %s674
          %680 = dma.vmem_to_hbm [thread:$0]  %s675, 256, %s673, %s661, 128, 128, 8
        $region40: #{pattern_c_forward.1} parent=31 // pred_fallthru
          _
      $region32: #{pattern_c_forward.1} parent=5 // pred_fallthru
        _
      %p681 = scmp.le.s32.totalorder 2, %s14
      // Predicated region
      $region41: #{pattern_c_forward.1} parent=5 // pred_check
        %p682 = pneg %p681
      $region42: #{pattern_c_forward.1} parent=5 // pred_check_branch
        %684 = sbr.rel (%p682) target = $region44
      $region43: #{pattern_c_forward.1} parent=5 // pred_region
        %s685 = ssub.s32 %s14, 2
        // Predicated region
        $region45: #{pattern_c_forward.1} parent=43 // pred_check
          %p686 = pneg %p111
        $region46: #{pattern_c_forward.1} parent=43 // pred_check_branch
          %688 = sbr.rel (%p686) target = $region48
        $region47: #{pattern_c_forward.1} parent=43 // pred_region
          %s689 = sand.u32 %s96, 1
          %s690 = scalar_lea.sflag [#allocation4], %s689
          %s691 = sand.u32 %s96, 1
          %s692 = smul.addr %s691, 16
          %s693 = scalar_lea.vmem [#allocation6], %s692
          %694 = dma.done %s690, 256
        $region48: #{pattern_c_forward.1} parent=43 // pred_fallthru
          _
      $region44: #{pattern_c_forward.1} parent=5 // pred_fallthru
        _
    $region6: #{pattern_c_forward.1} parent=1 // loop_footer
      %s18 = sadd.s32 1, %s14
    $region7: #{pattern_c_forward.1} parent=1 // loop_footer_branch
      %13 = sbr.rel target = $region3
    $region8: #{pattern_c_forward.1} parent=1 // loop_exit
      _
    %695 = vsyncpa [#allocation4], 1
    %s696 = scalar_lea.sflag [#allocation4], 1
    %697 = vsyncpa %s696, 1
    %698 = vsyncpa [#allocation5], 1
    %s699 = scalar_lea.sflag [#allocation5], 1
    %700 = vsyncpa %s699, 1

</llo_original>
